<compile_context>
chip_gen: v7x
topology: tpu7x:2x2x1
jax: 0.10.0
libtpu: 0.0.40
codegen_flags: <defaults>
</compile_context>

<pallas_src>
import functools

import jax
import jax.numpy as jnp
from jax.experimental import pallas as pl
from jax.experimental.pallas import tpu as pltpu

EPS = 1e-07


def _round_up(v, mult):
    return -(-v // mult) * mult


def _cdiv(a, b):
    return -(-a // b)


def _nce_partial_kernel(x_ref, out_ref, *, c, inv, bsz, tile_b, need_mask):
    """Per-tile partial of sum(log_D1)+sum(log_D0) (normalized rewrite)."""
    x = x_ref[...].astype(jnp.float32)                 # (tile_b, k), in-kernel cast
    log_all = jnp.log((x + c) * inv)                   # (tile_b, k)  EUP: 1 log/elem
    log_pos = jnp.log(x[:, 0:1] * inv)                 # (tile_b, 1)  EUP: 1 log/row

    # Reduce the lane axis first: the tail mask (if any) then only touches the
    # (tile_b, 1) row sums, and per-tile partial magnitudes stay small.
    row_sum = log_pos - jnp.sum(log_all, axis=-1, keepdims=True)   # (tile_b, 1)

    if need_mask:
        # Rows of the last block that stick out past bsz contain undefined
        # data, so log() there may be NaN/-inf.  jnp.where is a select, so the
        # garbage is discarded, never propagated.
        row = (pl.program_id(0) * tile_b
               + jax.lax.broadcasted_iota(jnp.int32, (tile_b, 1), 0))
        row_sum = jnp.where(row < bsz, row_sum, 0.0)

    partial = jnp.sum(row_sum)
    # Lane-dense, unmasked store of the per-tile scalar (wrapper reads [:,0,0]).
    out_ref[...] = jnp.broadcast_to(partial, (1, 8, 128)).astype(jnp.float32)


def nce_criterion_npid(x: jax.Array, n_data: int, *,
                       max_tile_rows: int = 2048,
                       tile_vmem_budget_bytes: int = 8 * 1024 * 1024,
                       min_tile_bytes: int = 2 * 1024 * 1024,
                       target_steps: int = 4) -> jax.Array:
    """Pallas implementation of NCECriterion_NPID.forward."""
    assert x.ndim == 2 and x.shape[1] >= 2, "expected x of shape (bsz, m+1), m>=1"
    bsz, k = x.shape
    m = k - 1
    pn = 1.0 / float(n_data)
    c = float(m) * pn + EPS            # denominator shift  m*Pn + eps
    inv = 1.0 / (float(m) * pn)        # per-element normalizer 1/(m*Pn)

    # ---- tile selection (dtype- and lane-padding-aware) --------------------
    padded_k = _round_up(k, 128)                       # lane padding in VMEM
    bytes_per_row = padded_k * x.dtype.itemsize        # real streamed dtype

    if bsz < 16:
        # Too small to split into >=2 tiles of >=8 rows: single full-array block.
        tile_b = bsz
    else:
        # Rows that fit under the per-buffer VMEM budget (BlockSpec x2 buffers).
        rows_fit = max(8, (tile_vmem_budget_bytes // bytes_per_row) // 8 * 8)
        tile_cap = max(8, min(int(max_tile_rows), int(rows_fit)))
        # Prefer >= target_steps grid steps so the DMA pipeline actually
        # overlaps compute (and v7x can shard tiles across both TCs), but never
        # shrink a tile's DMA below ~min_tile_bytes to get there.
        even_split = _round_up(_cdiv(bsz, target_steps), 8)
        if even_split * bytes_per_row >= min_tile_bytes:
            tile_b = min(tile_cap, even_split)
        else:
            tile_b = min(tile_cap, _round_up(_cdiv(bsz, 2), 8))
        # Best-effort: make the tile count even for v7x megacore balance.
        nt = _cdiv(bsz, tile_b)
        if nt > 1 and nt % 2 == 1:
            alt = _round_up(_cdiv(bsz, nt + 1), 8)
            if alt >= 8 and alt * bytes_per_row >= min_tile_bytes:
                tile_b = alt

    tile_b = int(tile_b)
    num_tiles = _cdiv(bsz, tile_b)
    need_mask = (bsz % tile_b) != 0

    kernel = functools.partial(_nce_partial_kernel, c=c, inv=inv, bsz=bsz,
                               tile_b=tile_b, need_mask=need_mask)

    partials = pl.pallas_call(
        kernel,
        out_shape=jax.ShapeDtypeStruct((num_tiles, 8, 128), jnp.float32),
        grid=(num_tiles,),
        in_specs=[pl.BlockSpec((tile_b, k), lambda i: (i, 0))],
        out_specs=pl.BlockSpec((1, 8, 128), lambda i: (i, 0, 0)),
        compiler_params=pltpu.CompilerParams(
            dimension_semantics=("parallel",),
            # 2x double-buffered input tile + compiler temporaries; leaves
            # headroom under v7x's 64 MiB/TC (128 MiB physical on v5e/v6e).
            vmem_limit_bytes=48 * 1024 * 1024),
        cost_estimate=pl.CostEstimate(
            flops=3 * bsz * k,
            transcendentals=bsz * (k + 1),
            bytes_accessed=bsz * k * x.dtype.itemsize + num_tiles * 8 * 128 * 4),
    )(x)

    # Tiny finalize in plain JAX: sum per-tile partials, negate, /bsz.
    total = jnp.sum(partials[:, 0, 0])
    loss = -total / jnp.float32(bsz)
    return loss.reshape((1,))


def _reference(x, n_data):
    # Pure-JAX reference mirroring the PyTorch module exactly.
    bsz, k = x.shape
    m = k - 1
    pn = 1.0 / float(n_data)
    p_pos = x[:, 0]
    log_d1 = jnp.log(p_pos / (p_pos + (m * pn + EPS)))
    p_neg = x[:, 1:]
    log_d0 = jnp.log((m * pn) / (p_neg + (m * pn + EPS)))
    return (-(jnp.sum(log_d1) + jnp.sum(log_d0)) / bsz).reshape((1,))


if __name__ == "__main__":
    key = jax.random.PRNGKey(0)
    k1, k2, k3, k4 = jax.random.split(key, 4)

    # Case 1: small NPID-style scores, single full-block path (bsz < 16).
    x1 = jax.random.uniform(k1, (8, 17), dtype=jnp.float32,
                            minval=0.01, maxval=1.0)
    l1 = nce_criterion_npid(x1, 128)
    jax.block_until_ready(l1)
    r1 = _reference(x1, 128)
    assert jnp.allclose(l1, r1, rtol=1e-5, atol=1e-5), (l1, r1)

    # Case 2: tiled + masked ragged tail (3 row-tiles of 8, bsz=20).
    x2 = jax.random.uniform(k2, (20, 17), dtype=jnp.float32,
                            minval=0.01, maxval=1.0)
    l2 = nce_criterion_npid(x2, 256, max_tile_rows=8)
    jax.block_until_ready(l2)
    r2 = _reference(x2, 256)
    assert jnp.allclose(l2, r2, rtol=1e-5, atol=1e-5), (l2, r2)

    # Case 3: multi-tile, even tile count, unmasked path (2 tiles of 16).
    x3 = jax.random.uniform(k3, (32, 256), dtype=jnp.float32,
                            minval=0.01, maxval=1.0)
    l3 = nce_criterion_npid(x3, 1024)
    jax.block_until_ready(l3)
    r3 = _reference(x3, 1024)
    assert jnp.allclose(l3, r3, rtol=1e-5, atol=1e-5), (l3, r3)

    # Case 4: bf16 input streamed natively (f32 cast in-kernel), masked tail.
    x4 = jax.random.uniform(k4, (24, 33), dtype=jnp.float32,
                            minval=0.01, maxval=1.0).astype(jnp.bfloat16)
    l4 = nce_criterion_npid(x4, 512)
    jax.block_until_ready(l4)
    r4 = _reference(x4.astype(jnp.float32), 512)
    assert jnp.allclose(l4, r4, rtol=1e-4, atol=1e-4), (l4, r4)

    print("KERNEL_OK")
</pallas_src>

<mosaic_0001>
module attributes {stable_mosaic.version = 11 : i64} {
  func.func @_nce_partial_kernel(%arg0: i32, %arg1: memref<8x17xf32, #tpu.memory_space<vmem>>, %arg2: memref<1x8x128xf32, #tpu.memory_space<vmem>>) attributes {dimension_semantics = [#tpu.dimension_semantics<parallel>], iteration_bounds = array<i64: 1>, scalar_prefetch = 0 : i64, scratch_operands = 0 : i64, tpu.core_type = #tpu.core_type<tc>, window_params = [{transform_indices = @transform_0, window_bounds = array<i64: 8, 17>}, {transform_indices = @transform_1, window_bounds = array<i64: 1, 8, 128>}]} {
    %c0 = arith.constant 0 : index
    %c0_0 = arith.constant 0 : index
    %0 = vector.load %arg1[%c0, %c0_0] : memref<8x17xf32, #tpu.memory_space<vmem>>, vector<8x17xf32>
    %cst = arith.constant 0.125000104 : f32
    %1 = vector.broadcast %cst : f32 to vector<8x17xf32>
    %2 = arith.addf %0, %1 : vector<8x17xf32>
    %cst_1 = arith.constant 8.000000e+00 : f32
    %3 = vector.broadcast %cst_1 : f32 to vector<8x17xf32>
    %4 = arith.mulf %2, %3 : vector<8x17xf32>
    %5 = math.log %4 : vector<8x17xf32>
    %6 = vector.extract_strided_slice %0 {offsets = [0, 0], sizes = [8, 1], strides = [1, 1]} : vector<8x17xf32> to vector<8x1xf32>
    %cst_2 = arith.constant 8.000000e+00 : f32
    %7 = vector.broadcast %cst_2 : f32 to vector<8x1xf32>
    %8 = arith.mulf %6, %7 : vector<8x1xf32>
    %9 = math.log %8 : vector<8x1xf32>
    %cst_3 = arith.constant dense<0.000000e+00> : vector<8xf32>
    %10 = vector.multi_reduction <add>, %5, %cst_3 [1] : vector<8x17xf32> to vector<8xf32>
    %11 = vector.shape_cast %10 : vector<8xf32> to vector<8x1xf32>
    %12 = arith.subf %9, %11 : vector<8x1xf32>
    %13 = vector.shape_cast %12 : vector<8x1xf32> to vector<1x8x1xf32>
    %cst_4 = arith.constant dense<0.000000e+00> : vector<1xf32>
    %14 = vector.multi_reduction <add>, %13, %cst_4 [1, 2] : vector<1x8x1xf32> to vector<1xf32>
    %15 = vector.shape_cast %14 : vector<1xf32> to vector<1x1x1xf32>
    %16 = vector.extract %15[0, 0, 0] : f32 from vector<1x1x1xf32>
    %17 = vector.broadcast %16 : f32 to vector<1x8x128xf32>
    %c0_5 = arith.constant 0 : index
    %c0_6 = arith.constant 0 : index
    %c0_7 = arith.constant 0 : index
    %18 = vector.load %arg2[%c0_5, %c0_6, %c0_7] : memref<1x8x128xf32, #tpu.memory_space<vmem>>, vector<1x8x128xf32>
    tpu.vector_store %arg2[%c0_5, %c0_6, %c0_7], %17 {strides = array<i32>} : memref<1x8x128xf32, #tpu.memory_space<vmem>>, vector<1x8x128xf32>,
    return
  }
  func.func @transform_0(%arg0: i32) -> (i32, i32) {
    %c0_i32 = arith.constant 0 : i32
    %c0_i32_0 = arith.constant 0 : i32
    return %arg0, %c0_i32 : i32, i32
  }
  func.func @transform_1(%arg0: i32) -> (i32, i32, i32) {
    %c0_i32 = arith.constant 0 : i32
    %c0_i32_0 = arith.constant 0 : i32
    %c0_i32_1 = arith.constant 0 : i32
    return %arg0, %c0_i32, %c0_i32_0 : i32, i32, i32
  }
}

</mosaic_0001>

<llo_original>
// kernel: tpu_custom_call.1
$region0: #{tpu_custom_call.1}
  #allocation0 [shape = 'u32[]', space=smem, size = 0x4, offset = 0x4, fixed_abs, tag = 'smem constant byte address 0x4 - core index']
  #allocation1 [shape = 'u32[144,128]{1,0:T(1,128)}', space=vmem, size = 0x12000, scoped, tag = 'internal scratch']
  %s0 = inlined_call_operand.hbm [shape: f32[8,17], index: 0, kind: input, shape index: {}]
  %s1 = inlined_call_operand.hbm [shape: f32[1,8,128], index: 1, kind: output, shape index: {}]
  %s2 = sld [smem:[#allocation0]]
  $region18: #{tpu_custom_call.1} parent=0
    _
  %s4 = ssub.s32 1, %s2
  %s5 = scalar_select 0, %s4, %s2
  $region1: #{tpu_custom_call.1} parent=0
    #allocation2 [shape = 'u8[4096]{0}', space=vmem, size = 0x1000, scoped, tag = 'input window, operand 0, single buffered']
    #allocation3 [shape = 's32[1]{0}', space=sflag, size = 0x4, scoped, tag = 'scoped memory for tpu_custom_call.1']
    #allocation4 [shape = 's32[1]{0}', space=sflag, size = 0x4, scoped, tag = 'scoped memory for tpu_custom_call.1']
    #allocation5 [shape = 'u8[4096]{0}', space=vmem, size = 0x1000, scoped, tag = 'output window, operand 0, single buffered']
    %6 = vsyncpa [#allocation3], 0
    %7 = vsyncpa [#allocation4], 0
    // Predicated region
    $region2: #{tpu_custom_call.1} parent=1 // pred_check
      _
    $region3: #{tpu_custom_call.1} parent=1 // pred_check_branch
      %9 = sbr.rel (0) target = $region5
    $region4: #{tpu_custom_call.1} parent=1 // pred_region
      %s11 = ssub.s32 128, 128
      %12 = vsyncadd [#allocation3], %s11
      %s14 = sshll.u32 [#allocation2], 4
      %s15 = int_to_ptr.vmem [resolvable:$true] %s14
      %17 = dma.hbm_to_vmem [thread:$0]  %s0, 128, %s15, [#allocation3]
    $region5: #{tpu_custom_call.1} parent=1 // pred_fallthru
      _
    // Predicated region
    $region6: #{tpu_custom_call.1} parent=1 // pred_check
      _
    $region7: #{tpu_custom_call.1} parent=1 // pred_check_branch
      %19 = sbr.rel (0) target = $region9
    $region8: #{tpu_custom_call.1} parent=1 // pred_region
      %20 = dma.done [#allocation3], 128
    $region9: #{tpu_custom_call.1} parent=1 // pred_fallthru
      _
    %v21 = vld [vmem:[#allocation2] sm:$0xff]
    %v22 = vadd.f32 %v21, 0.1250001
    %v23 = vmul.f32 %v22, 8.0
    %v24 = vlog2.pop %v23
    %v25 = vmul.f32 %v24, 0.6931472
    %v26 = vmul.f32 %v21, 8.0
    %v27 = vlog2.pop %v26
    %v28 = vmul.f32 %v27, 0.6931472
    %vm29 = vcmask 138240
    %v30 = vsel %vm29, %v25, 0.0
    %31 = vadd.xlane.f32.xlu0 %v30
    %v32 = vpop.xlane.xlu0 %31
    %v33 = vsub.f32 %v28, %v32
    %vm34 = vcmask 7168
    %v35 = vsel %vm34, %v33, 0.0
    %36 = vadd.xlane.f32.xlu0 %v35
    %v37 = vpop.xlane.xlu0 %36
    %v38 = vrot.slane %v37, 4
    %v39 = vadd.f32 %v37, %v38
    %v40 = vrot.slane %v39, 2
    %v41 = vadd.f32 %v39, %v40
    %v42 = vrot.slane %v41, 1
    %v43 = vadd.f32 %v41, %v42
    %s44 = vtos %v43
    %v45 = vstv %s44
    %46 = vst [vmem:[#allocation5] sm:$0xff] %v45
    // Predicated region
    $region10: #{tpu_custom_call.1} parent=1 // pred_check
      _
    $region11: #{tpu_custom_call.1} parent=1 // pred_check_branch
      %48 = sbr.rel (0) target = $region13
    $region12: #{tpu_custom_call.1} parent=1 // pred_region
      %s50 = ssub.s32 128, 128
      %51 = vsyncadd [#allocation4], %s50
      %s53 = sshll.u32 [#allocation5], 4
      %s54 = int_to_ptr.vmem [resolvable:$true] %s53
      %56 = dma.vmem_to_hbm [thread:$0]  %s54, 128, %s1, [#allocation4]
    $region13: #{tpu_custom_call.1} parent=1 // pred_fallthru
      _
    // Predicated region
    $region14: #{tpu_custom_call.1} parent=1 // pred_check
      _
    $region15: #{tpu_custom_call.1} parent=1 // pred_check_branch
      %58 = sbr.rel (0) target = $region17
    $region16: #{tpu_custom_call.1} parent=1 // pred_region
      %59 = dma.done [#allocation4], 128
    $region17: #{tpu_custom_call.1} parent=1 // pred_fallthru
      _
    %60 = vsyncpa [#allocation3], 1
    %61 = vsyncpa [#allocation4], 1

</llo_original>
